<compile_context>
chip_gen: v7x
topology: tpu7x:2x2x1
jax: 0.10.0
libtpu: 0.0.40
codegen_flags: <defaults>
</compile_context>

<pallas_src>
from functools import partial

import jax
import jax.numpy as jnp
from jax.experimental import pallas as pl
from jax.experimental.pallas import tpu as pltpu


def _ltv_vf_kernel(obs_ref, w_ref, b_ref, out_ref):
    # obs_ref : (TN, H*D)  lane-dense tile of flattened observations
    # w_ref   : (H*D, H)   block-diagonal time-varying weights (grid-invariant)
    # b_ref   : (1, H)     time-varying biases (grid-invariant)
    # out_ref : (TN, H)    values for this tile of paths
    out_ref[...] = (
        jnp.dot(obs_ref[...], w_ref[...], preferred_element_type=jnp.float32)
        + b_ref[...]
    )


def _ru(x, m):
    """Round x up to a multiple of m."""
    return ((x + m - 1) // m) * m


def _vmem_capacity_bytes():
    """Physical VMEM per core (128 MiB v5e/v6e, 64 MiB v7x); safe fallback."""
    try:
        return int(pltpu.get_tpu_info().vmem_capacity_bytes)
    except Exception:
        return 64 * 1024 * 1024  # conservative: smallest (v7x per-TC)


@partial(jax.jit, static_argnames=("tile", "vmem_limit"))
def _ltv_vf_impl(observations, weights, biases, *, tile, vmem_limit):
    N, H, D = observations.shape
    HD = H * D
    n_tiles = pl.cdiv(N, tile)

    # Fused into this jit: reshape of the contiguous (N,H,D) array is a no-op.
    obs_flat = observations.reshape(N, HD).astype(jnp.float32)

    # Block-diagonal weight matrix: w_mat[h*D + d, h] = weights[h, d]
    eye = jnp.eye(H, dtype=jnp.float32)
    w_mat = (weights.astype(jnp.float32)[:, :, None] * eye[:, None, :]).reshape(HD, H)
    biases2d = biases.astype(jnp.float32).reshape(1, H)

    return pl.pallas_call(
        _ltv_vf_kernel,
        out_shape=jax.ShapeDtypeStruct((N, H), jnp.float32),
        grid_spec=pltpu.PrefetchScalarGridSpec(
            num_scalar_prefetch=0,
            grid=(n_tiles,),
            in_specs=[
                pl.BlockSpec((tile, HD), lambda i: (i, 0)),
                pl.BlockSpec((HD, H), lambda i: (0, 0)),  # invariant operand
                pl.BlockSpec((1, H), lambda i: (0, 0)),   # invariant operand
            ],
            out_specs=pl.BlockSpec((tile, H), lambda i: (i, 0)),
        ),
        compiler_params=pltpu.CompilerParams(
            dimension_semantics=("parallel",),
            vmem_limit_bytes=vmem_limit,
        ),
        cost_estimate=pl.CostEstimate(
            # Actual MXU work (block-diagonal matmul) and actual HBM traffic.
            flops=2 * N * HD * H,
            transcendentals=0,
            bytes_accessed=4 * (N * HD + N * H + HD * H + H),
        ),
    )(obs_flat, w_mat, biases2d)


def linear_time_varying_vf(observations, weights, biases, *, tile_paths=8192):
    """observations: [N, H, D] f32; weights: [H, D] f32; biases: [H] f32 -> [N, H] f32"""
    N, H, D = observations.shape
    assert weights.shape == (H, D)
    assert biases.shape == (H,)
    HD = H * D

    # ---- generation-aware tile sizing -------------------------------------
    vmem_cap = _vmem_capacity_bytes()
    # Double-buffered obs + out bytes per path row (last dims lane-padded to 128).
    row_bytes_2buf = 2 * (_ru(HD, 128) + _ru(H, 128)) * 4
    max_tile = max(8, (int(0.45 * vmem_cap) // row_bytes_2buf) // 8 * 8)

    tile = max(8, (min(tile_paths, max_tile) // 8) * 8)
    tile = min(tile, _ru(N, 8))  # never allocate a block wider than (rounded) N

    # Keep >= 2 grid steps when there is enough work so the single "parallel"
    # grid axis can actually shard across v7x's 2 TensorCores (harmless ~0.35us
    # extra step on single-TC v5e/v6e).
    if pl.cdiv(N, tile) < 2 and N > 8:
        tile = max(8, _ru(pl.cdiv(N, 2), 8))

    # ---- explicit scoped-VMEM limit: all buffers double-buffered + headroom.
    needed = (
        2 * tile * (_ru(HD, 128) + _ru(H, 128)) * 4          # obs + out blocks
        + 2 * (_ru(HD, 8) * _ru(H, 128) + 8 * _ru(H, 128)) * 4  # w_mat + bias
        + (4 << 20)                                           # headroom
    )
    vmem_limit = int(min(max(needed, 32 << 20), 0.9 * vmem_cap))

    return _ltv_vf_impl(observations, weights, biases, tile=tile, vmem_limit=vmem_limit)


if __name__ == "__main__":
    key = jax.random.PRNGKey(0)
    k_obs, k_w, k_b, k_obs2 = jax.random.split(key, 4)

    # Module hyper-params (small, consistent with forward semantics)
    num_paths, horizon, d_obs = 16, 8, 32

    observations = jax.random.normal(k_obs, (num_paths, horizon, d_obs), dtype=jnp.float32)
    # Module __init__ uses zeros for parameters; use random values of the same
    # shapes so the kernel is non-trivially tested.
    weights = jax.random.normal(k_w, (horizon, d_obs), dtype=jnp.float32) * 0.1
    biases = jax.random.normal(k_b, (horizon,), dtype=jnp.float32) * 0.1

    values = jax.block_until_ready(linear_time_varying_vf(observations, weights, biases))
    ref = jnp.sum(observations * weights[None, :, :], axis=-1) + biases[None, :]
    assert values.shape == (num_paths, horizon)
    assert jnp.allclose(values, ref, atol=1e-5, rtol=1e-5), "mismatch vs reference"

    # Ragged case: N not a multiple of the sublane/tile size (partial last block,
    # handled by Pallas with no wrapper-side padding).
    n2 = 13
    obs2 = jax.random.normal(k_obs2, (n2, horizon, d_obs), dtype=jnp.float32)
    values2 = jax.block_until_ready(linear_time_varying_vf(obs2, weights, biases))
    ref2 = jnp.sum(obs2 * weights[None, :, :], axis=-1) + biases[None, :]
    assert values2.shape == (n2, horizon)
    assert jnp.allclose(values2, ref2, atol=1e-5, rtol=1e-5), "ragged-tail mismatch"

    print("KERNEL_OK")
</pallas_src>

<mosaic_0001>
module attributes {stable_mosaic.version = 11 : i64} {
  func.func @_ltv_vf_kernel(%arg0: i32, %arg1: memref<8x256xf32, #tpu.memory_space<vmem>>, %arg2: memref<256x8xf32, #tpu.memory_space<vmem>>, %arg3: memref<1x8xf32, #tpu.memory_space<vmem>>, %arg4: memref<8x8xf32, #tpu.memory_space<vmem>>) attributes {dimension_semantics = [#tpu.dimension_semantics<parallel>], iteration_bounds = array<i64: 2>, scalar_prefetch = 0 : i64, scratch_operands = 0 : i64, tpu.core_type = #tpu.core_type<tc>, window_params = [{transform_indices = @transform_0, window_bounds = array<i64: 8, 256>}, {pipeline_mode = #tpu.pipeline_mode<synchronous>, transform_indices = @transform_1, window_bounds = array<i64: 256, 8>}, {pipeline_mode = #tpu.pipeline_mode<synchronous>, transform_indices = @transform_2, window_bounds = array<i64: 1, 8>}, {transform_indices = @transform_3, window_bounds = array<i64: 8, 8>}]} {
    %c0 = arith.constant 0 : index
    %c0_0 = arith.constant 0 : index
    %0 = vector.load %arg1[%c0, %c0_0] : memref<8x256xf32, #tpu.memory_space<vmem>>, vector<8x256xf32>
    %c0_1 = arith.constant 0 : index
    %c0_2 = arith.constant 0 : index
    %1 = vector.load %arg2[%c0_1, %c0_2] : memref<256x8xf32, #tpu.memory_space<vmem>>, vector<256x8xf32>
    %cst = arith.constant dense<0.000000e+00> : vector<8x8xf32>
    %2 = tpu.matmul %0, %1, %cst {dimension_numbers = #tpu.dot_dimension_numbers<[1], [0], [0], [1], [0, 0, 1, 1], [], []>} : vector<8x256xf32>, vector<256x8xf32>, vector<8x8xf32> -> vector<8x8xf32>
    %c0_3 = arith.constant 0 : index
    %c0_4 = arith.constant 0 : index
    %3 = vector.load %arg3[%c0_3, %c0_4] : memref<1x8xf32, #tpu.memory_space<vmem>>, vector<1x8xf32>
    %4 = vector.broadcast %3 : vector<1x8xf32> to vector<8x8xf32>
    %5 = arith.addf %2, %4 : vector<8x8xf32>
    %c0_5 = arith.constant 0 : index
    %c0_6 = arith.constant 0 : index
    %6 = vector.load %arg4[%c0_5, %c0_6] : memref<8x8xf32, #tpu.memory_space<vmem>>, vector<8x8xf32>
    tpu.vector_store %arg4[%c0_5, %c0_6], %5 {strides = array<i32>} : memref<8x8xf32, #tpu.memory_space<vmem>>, vector<8x8xf32>,
    return
  }
  func.func @transform_0(%arg0: i32) -> (i32, i32) {
    %c0_i32 = arith.constant 0 : i32
    %c0_i32_0 = arith.constant 0 : i32
    return %arg0, %c0_i32 : i32, i32
  }
  func.func @transform_1(%arg0: i32) -> (i32, i32) {
    %c0_i32 = arith.constant 0 : i32
    %c0_i32_0 = arith.constant 0 : i32
    %c0_i32_1 = arith.constant 0 : i32
    return %c0_i32, %c0_i32_0 : i32, i32
  }
  func.func @transform_2(%arg0: i32) -> (i32, i32) {
    %c0_i32 = arith.constant 0 : i32
    %c0_i32_0 = arith.constant 0 : i32
    %c0_i32_1 = arith.constant 0 : i32
    return %c0_i32, %c0_i32_0 : i32, i32
  }
  func.func @transform_3(%arg0: i32) -> (i32, i32) {
    %c0_i32 = arith.constant 0 : i32
    %c0_i32_0 = arith.constant 0 : i32
    return %arg0, %c0_i32 : i32, i32
  }
}

</mosaic_0001>

<llo_original>
// kernel: _ltv_vf_impl.1
$region0: #{_ltv_vf_impl.1}
  #allocation0 [shape = 'u32[]', space=smem, size = 0x4, offset = 0x4, fixed_abs, tag = 'smem constant byte address 0x4 - core index']
  #allocation1 [shape = 'u32[144,128]{1,0:T(1,128)}', space=vmem, size = 0x12000, scoped, tag = 'internal scratch']
  %s0 = inlined_call_operand.vmem [shape: f32[16,256], index: 0, kind: input, shape index: {}]
  %s1 = inlined_call_operand.vmem [shape: f32[256,8], index: 1, kind: input, shape index: {}]
  %s2 = inlined_call_operand.vmem [shape: f32[1,8], index: 2, kind: input, shape index: {}]
  %s3 = inlined_call_operand.vmem [shape: f32[16,8], index: 3, kind: output, shape index: {}]
  %s4 = sld [smem:[#allocation0]]
  $region45: #{_ltv_vf_impl.1} parent=0
    _
  %s6 = ssub.s32 1, %s4
  %s7 = scalar_select 0, %s6, %s4
  loop: start=0, step=1, limit=4
  $region2: #{_ltv_vf_impl.1} parent=0 // loop_pre_header
    _
  $region3: #{_ltv_vf_impl.1} parent=0 // loop_header
    %s9 = sphi 0, %s13
    %p10 = scmp.ge.s32.totalorder %s9, 4
    %s19 = sphi 0, %s21
    %s22 = sphi 0, %s19
    %s23 = sphi 0, %s22
    %s39 = sphi 0, %s23
    %s43 = sphi 0, %s43
    %s45 = sphi 0, %s43
    %s46 = sphi 0, %s45
    %s60 = sphi 0, %s46
    %s64 = sphi 0, %s64
    %s66 = sphi 0, %s64
    %s67 = sphi 0, %s66
    %s81 = sphi 0, %s67
    %s87 = sphi 0, %s89
    %s90 = sphi 0, %s87
    %s91 = sphi 0, %s90
    %s107 = sphi 0, %s91
  $region4: #{_ltv_vf_impl.1} parent=0 // loop_header_branch
    %12 = sbr.rel (%p10) target = $region8
  $region5: #{_ltv_vf_impl.1} parent=0 // loop_body
    %s14 = ssub.s32 %s9, 1
    %s15 = ssub.s32 %s9, 2
    %s16 = sadd.s32 %s9, 1
    %s17 = ssub.s32 %s9, %s16
    %p18 = scmp.eq.s32.totalorder %s17, 0
    %s20 = sadd.s32 %s19, 1
    %s21 = scalar_select %p18, %s19, %s20
    %p24 = pneg %p18
    %p25 = scmp.eq.s32.totalorder %s9, 1
    %p26 = por %p24, %p25
    %p27 = scmp.ne.s32.totalorder %s19, %s22
    %p28 = scmp.eq.s32.totalorder %s9, 0
    %p29 = por %p27, %p28
    %p30 = scmp.ne.s32.totalorder %s19, %s22
    %p31 = scmp.eq.s32.totalorder %s14, 1
    %p32 = por %p30, %p31
    %p33 = scmp.ne.s32.totalorder %s22, %s23
    %p34 = scmp.eq.s32.totalorder %s14, 0
    %p35 = por %p33, %p34
    %p36 = scmp.ne.s32.totalorder %s22, %s23
    %p37 = scmp.eq.s32.totalorder %s15, 1
    %p38 = por %p36, %p37
    %p40 = scmp.ne.s32.totalorder %s23, %s39
    %p41 = scmp.eq.s32.totalorder %s15, 0
    %p42 = por %p40, %p41
    %s44 = sadd.s32 %s43, 1
    %p47 = scmp.eq.s32.totalorder %s9, 1
    %p48 = scmp.ne.s32.totalorder %s43, %s45
    %p49 = scmp.eq.s32.totalorder %s9, 0
    %p50 = por %p48, %p49
    %p51 = scmp.ne.s32.totalorder %s43, %s45
    %p52 = scmp.eq.s32.totalorder %s14, 1
    %p53 = por %p51, %p52
    %p54 = scmp.ne.s32.totalorder %s45, %s46
    %p55 = scmp.eq.s32.totalorder %s14, 0
    %p56 = por %p54, %p55
    %p57 = scmp.ne.s32.totalorder %s45, %s46
    %p58 = scmp.eq.s32.totalorder %s15, 1
    %p59 = por %p57, %p58
    %p61 = scmp.ne.s32.totalorder %s46, %s60
    %p62 = scmp.eq.s32.totalorder %s15, 0
    %p63 = por %p61, %p62
    %s65 = sadd.s32 %s64, 1
    %p68 = scmp.eq.s32.totalorder %s9, 1
    %p69 = scmp.ne.s32.totalorder %s64, %s66
    %p70 = scmp.eq.s32.totalorder %s9, 0
    %p71 = por %p69, %p70
    %p72 = scmp.ne.s32.totalorder %s64, %s66
    %p73 = scmp.eq.s32.totalorder %s14, 1
    %p74 = por %p72, %p73
    %p75 = scmp.ne.s32.totalorder %s66, %s67
    %p76 = scmp.eq.s32.totalorder %s14, 0
    %p77 = por %p75, %p76
    %p78 = scmp.ne.s32.totalorder %s66, %s67
    %p79 = scmp.eq.s32.totalorder %s15, 1
    %p80 = por %p78, %p79
    %p82 = scmp.ne.s32.totalorder %s67, %s81
    %p83 = scmp.eq.s32.totalorder %s15, 0
    %p84 = por %p82, %p83
    %s85 = ssub.s32 %s9, %s16
    %p86 = scmp.eq.s32.totalorder %s85, 0
    %s88 = sadd.s32 %s87, 1
    %s89 = scalar_select %p86, %s87, %s88
    %p92 = pneg %p86
    %p93 = scmp.eq.s32.totalorder %s9, 1
    %p94 = por %p92, %p93
    %p95 = scmp.ne.s32.totalorder %s87, %s90
    %p96 = scmp.eq.s32.totalorder %s9, 0
    %p97 = por %p95, %p96
    %p98 = scmp.ne.s32.totalorder %s87, %s90
    %p99 = scmp.eq.s32.totalorder %s14, 1
    %p100 = por %p98, %p99
    %p101 = scmp.ne.s32.totalorder %s90, %s91
    %p102 = scmp.eq.s32.totalorder %s14, 0
    %p103 = por %p101, %p102
    %p104 = scmp.ne.s32.totalorder %s90, %s91
    %p105 = scmp.eq.s32.totalorder %s15, 1
    %p106 = por %p104, %p105
    %p108 = scmp.ne.s32.totalorder %s91, %s107
    %p109 = scmp.eq.s32.totalorder %s15, 0
    %p110 = por %p108, %p109
    %p111 = scmp.le.s32.totalorder 1, %s9
    %p112 = scmp.lt.s32.totalorder %s9, 3
    %p113 = pnand %p111, %p112
    %p114 = pneg %p113
    // Predicated region
    $region9: #{_ltv_vf_impl.1} parent=5 // pred_check
      _
    $region10: #{_ltv_vf_impl.1} parent=5 // pred_check_branch
      %116 = sbr.rel (%p113) target = $region12
    $region11: #{_ltv_vf_impl.1} parent=5 // pred_region
      %s117 = ssub.s32 %s9, 1
      // Predicated region
      $region13: #{_ltv_vf_impl.1} parent=11 // pred_check
        %p118 = pneg %p56
      $region14: #{_ltv_vf_impl.1} parent=11 // pred_check_branch
        %120 = sbr.rel (%p118) target = $region16
      $region15: #{_ltv_vf_impl.1} parent=11 // pred_region
        _
      $region16: #{_ltv_vf_impl.1} parent=11 // pred_fallthru
        _
      // Predicated region
      $region17: #{_ltv_vf_impl.1} parent=11 // pred_check
        %p121 = pneg %p77
      $region18: #{_ltv_vf_impl.1} parent=11 // pred_check_branch
        %123 = sbr.rel (%p121) target = $region20
      $region19: #{_ltv_vf_impl.1} parent=11 // pred_region
        _
      $region20: #{_ltv_vf_impl.1} parent=11 // pred_fallthru
        _
    $region12: #{_ltv_vf_impl.1} parent=5 // pred_fallthru
      _
    %p124 = scmp.lt.s32.totalorder %s9, 2
    // Predicated region
    $region21: #{_ltv_vf_impl.1} parent=5 // pred_check
      %p125 = pneg %p124
    $region22: #{_ltv_vf_impl.1} parent=5 // pred_check_branch
      %127 = sbr.rel (%p125) target = $region24
    $region23: #{_ltv_vf_impl.1} parent=5 // pred_region
      // Predicated region
      $region25: #{_ltv_vf_impl.1} parent=23 // pred_check
        %p128 = pneg %p29
      $region26: #{_ltv_vf_impl.1} parent=23 // pred_check_branch
        %130 = sbr.rel (%p128) target = $region28
      $region27: #{_ltv_vf_impl.1} parent=23 // pred_region
        %p131 = scmp.lt.s32.totalorder %s9, 1
        %s132 = scalar_select %p131, %s9, 1
        %s133 = smul.addr %s132, 2
        %s134 = smul.addr %s133, 8
        %s135 = scalar_lea.vmem %s0, %s134
      $region28: #{_ltv_vf_impl.1} parent=23 // pred_fallthru
        _
    $region24: #{_ltv_vf_impl.1} parent=5 // pred_fallthru
      _
    %p136 = scmp.le.s32.totalorder 1, %s9
    %p137 = scmp.lt.s32.totalorder %s9, 3
    %p138 = pnand %p136, %p137
    %p139 = pneg %p138
    // Predicated region
    $region29: #{_ltv_vf_impl.1} parent=5 // pred_check
      _
    $region30: #{_ltv_vf_impl.1} parent=5 // pred_check_branch
      %141 = sbr.rel (%p138) target = $region32
    $region31: #{_ltv_vf_impl.1} parent=5 // pred_region
      %s142 = ssub.s32 %s9, 1
      %p143 = scmp.lt.s32.totalorder %s14, 1
      %s144 = scalar_select %p143, %s14, 1
      %s145 = smul.addr %s144, 2
      %s146 = smul.addr %s145, 8
      %s147 = scalar_lea.vmem %s0, %s146
      %p148 = pneg %p35
      %p149 = pneg %p32
      %p150 = pneg %p56
      %p151 = pneg %p53
      %p152 = pneg %p77
      %p153 = pneg %p74
      %p154 = pneg %p103
      %p155 = pneg %p100
      %p156 = scmp.lt.s32.totalorder %s14, 1
      %s157 = scalar_select %p156, %s14, 1
      %s158 = smul.addr %s157, 8
      %s159 = scalar_lea.vmem %s3, %s158
      %p160 = scmp.lt.s32.totalorder %s14, 1
      %s161 = scalar_select %p160, %s14, 1
      %s162 = smul.addr %s161, 2
      %s163 = smul.addr %s162, 8
      %s164 = scalar_lea.vmem %s0, %s163
      %p165 = scmp.lt.s32.totalorder %s14, 1
      %s166 = scalar_select %p165, %s14, 1
      %s167 = smul.addr %s166, 8
      %s168 = scalar_lea.vmem %s3, %s167
      %v169 = vld [vmem:[%s164] sm:$0xff]
      %v170 = vld [vmem:[%s164 + $0x8] sm:$0xff]
      %v171 = vld [vmem:[%s1] sm:$0xff]
      %v172 = vld [vmem:[%s1 + $0x8] sm:$0xff]
      %v173 = vld [vmem:[%s1 + $0x10] sm:$0xff]
      %v174 = vld [vmem:[%s1 + $0x18] sm:$0xff]
      %v175 = vld [vmem:[%s1 + $0x20] sm:$0xff]
      %v176 = vld [vmem:[%s1 + $0x28] sm:$0xff]
      %v177 = vld [vmem:[%s1 + $0x30] sm:$0xff]
      %v178 = vld [vmem:[%s1 + $0x38] sm:$0xff]
      %v179 = vld [vmem:[%s1 + $0x40] sm:$0xff]
      %v180 = vld [vmem:[%s1 + $0x48] sm:$0xff]
      %v181 = vld [vmem:[%s1 + $0x50] sm:$0xff]
      %v182 = vld [vmem:[%s1 + $0x58] sm:$0xff]
      %v183 = vld [vmem:[%s1 + $0x60] sm:$0xff]
      %v184 = vld [vmem:[%s1 + $0x68] sm:$0xff]
      %v185 = vld [vmem:[%s1 + $0x70] sm:$0xff]
      %v186 = vld [vmem:[%s1 + $0x78] sm:$0xff]
      %v187 = vld [vmem:[%s1 + $0x80] sm:$0xff]
      %v188 = vld [vmem:[%s1 + $0x88] sm:$0xff]
      %v189 = vld [vmem:[%s1 + $0x90] sm:$0xff]
      %v190 = vld [vmem:[%s1 + $0x98] sm:$0xff]
      %v191 = vld [vmem:[%s1 + $0xa0] sm:$0xff]
      %v192 = vld [vmem:[%s1 + $0xa8] sm:$0xff]
      %v193 = vld [vmem:[%s1 + $0xb0] sm:$0xff]
      %v194 = vld [vmem:[%s1 + $0xb8] sm:$0xff]
      %v195 = vld [vmem:[%s1 + $0xc0] sm:$0xff]
      %v196 = vld [vmem:[%s1 + $0xc8] sm:$0xff]
      %v197 = vld [vmem:[%s1 + $0xd0] sm:$0xff]
      %v198 = vld [vmem:[%s1 + $0xd8] sm:$0xff]
      %v199 = vld [vmem:[%s1 + $0xe0] sm:$0xff]
      %v200 = vld [vmem:[%s1 + $0xe8] sm:$0xff]
      %v201 = vld [vmem:[%s1 + $0xf0] sm:$0xff]
      %v202 = vld [vmem:[%s1 + $0xf8] sm:$0xff]
      %v203 = vld [vmem:[%s2] sm:$0x1]
      %v205 = vlaneseq
      %v206 = vshrl.u32 %v205, 7
      %v207 = vsub.s32 0, %v206
      %v208 = vrot.slane %v203, %v207
      %210 = vmatprep.subr.mxu0 0.0
      %211 = vmatpush1.msra.mxu0 %v171
      %212 = vmatprep.subr.mxu0 0.0
      %213 = vmatpush1.msra.mxu0 %v172
      %214 = vmatprep.subr.mxu0 0.0
      %215 = vmatpush1.msra.mxu0 %v173
      %216 = vmatprep.subr.mxu0 0.0
      %217 = vmatpush1.msra.mxu0 %v174
      %218 = vmatprep.subr.mxu0 0.0
      %219 = vmatpush1.msra.mxu0 %v175
      %220 = vmatprep.subr.mxu0 0.0
      %221 = vmatpush1.msra.mxu0 %v176
      %222 = vmatprep.subr.mxu0 0.0
      %223 = vmatpush1.msra.mxu0 %v177
      %224 = vmatprep.subr.mxu0 0.0
      %225 = vmatpush1.msra.mxu0 %v178
      %226 = vmatprep.subr.mxu0 0.0
      %227 = vmatpush1.msra.mxu0 %v179
      %228 = vmatprep.subr.mxu0 0.0
      %229 = vmatpush1.msra.mxu0 %v180
      %230 = vmatprep.subr.mxu0 0.0
      %231 = vmatpush1.msra.mxu0 %v181
      %232 = vmatprep.subr.mxu0 0.0
      %233 = vmatpush1.msra.mxu0 %v182
      %234 = vmatprep.subr.mxu0 0.0
      %235 = vmatpush1.msra.mxu0 %v183
      %236 = vmatprep.subr.mxu0 0.0
      %237 = vmatpush1.msra.mxu0 %v184
      %238 = vmatprep.subr.mxu0 0.0
      %239 = vmatpush1.msra.mxu0 %v185
      %240 = vmatprep.subr.mxu0 0.0
      %241 = vmatpush1.msra.mxu0 %v186
      %242 = vmatprep.subr.mxu0 0.0
      %243 = vmatpush1.msra.mxu0 %v187
      %244 = vmatprep.subr.mxu0 0.0
      %245 = vmatpush1.msra.mxu0 %v188
      %246 = vmatprep.subr.mxu0 0.0
      %247 = vmatpush1.msra.mxu0 %v189
      %248 = vmatprep.subr.mxu0 0.0
      %249 = vmatpush1.msra.mxu0 %v190
      %250 = vmatprep.subr.mxu0 0.0
      %251 = vmatpush1.msra.mxu0 %v191
      %252 = vmatprep.subr.mxu0 0.0
      %253 = vmatpush1.msra.mxu0 %v192
      %254 = vmatprep.subr.mxu0 0.0
      %255 = vmatpush1.msra.mxu0 %v193
      %256 = vmatprep.subr.mxu0 0.0
      %257 = vmatpush1.msra.mxu0 %v194
      %258 = vmatprep.subr.mxu0 0.0
      %259 = vmatpush1.msra.mxu0 %v195
      %260 = vmatprep.subr.mxu0 0.0
      %261 = vmatpush1.msra.mxu0 %v196
      %262 = vmatprep.subr.mxu0 0.0
      %263 = vmatpush1.msra.mxu0 %v197
      %264 = vmatprep.subr.mxu0 0.0
      %265 = vmatpush1.msra.mxu0 %v198
      %266 = vmatprep.subr.mxu0 0.0
      %267 = vmatpush1.msra.mxu0 %v199
      %268 = vmatprep.subr.mxu0 0.0
      %269 = vmatpush1.msra.mxu0 %v200
      %270 = vmatprep.subr.mxu0 0.0
      %271 = vmatpush1.msra.mxu0 %v201
      %272 = vmatprep.subr.mxu0 0.0
      %273 = vmatpush1.msra.mxu0 %v202
      %274 = vmatprep.mubr.f32.mxu0 %v170
      %275 = vmatmul.mubr.f32.gmra.mrb[0].mxu0 %v169
      %v276 = vpop.f32.mrb[0].mxu0
      %v277 = vadd.f32 %v208, %v276
      %v278 = vpop.f32.mrb[0].mxu0
      %279 = vdwg.mxu0
      %vm280 = vcmask 64512
      %281 = vst.msk [vmem:[%s168] sm:$0xff] %vm280, %v277
      %p282 = scmp.lt.s32.totalorder %s14, 1
      %s283 = scalar_select %p282, %s14, 1
      %s284 = smul.addr %s283, 8
      %s285 = scalar_lea.vmem %s3, %s284
      // Predicated region
      $region33: #{_ltv_vf_impl.1} parent=31 // pred_check
        %p286 = pneg %p100
      $region34: #{_ltv_vf_impl.1} parent=31 // pred_check_branch
        %288 = sbr.rel (%p286) target = $region36
      $region35: #{_ltv_vf_impl.1} parent=31 // pred_region
        _
      $region36: #{_ltv_vf_impl.1} parent=31 // pred_fallthru
        _
    $region32: #{_ltv_vf_impl.1} parent=5 // pred_fallthru
      _
    %p289 = scmp.le.s32.totalorder 2, %s9
    // Predicated region
    $region37: #{_ltv_vf_impl.1} parent=5 // pred_check
      %p290 = pneg %p289
    $region38: #{_ltv_vf_impl.1} parent=5 // pred_check_branch
      %292 = sbr.rel (%p290) target = $region40
    $region39: #{_ltv_vf_impl.1} parent=5 // pred_region
      %s293 = ssub.s32 %s9, 2
      // Predicated region
      $region41: #{_ltv_vf_impl.1} parent=39 // pred_check
        %p294 = pneg %p106
      $region42: #{_ltv_vf_impl.1} parent=39 // pred_check_branch
        %296 = sbr.rel (%p294) target = $region44
      $region43: #{_ltv_vf_impl.1} parent=39 // pred_region
        %p297 = scmp.lt.s32.totalorder %s15, 1
        %s298 = scalar_select %p297, %s15, 1
        %s299 = smul.addr %s298, 8
        %s300 = scalar_lea.vmem %s3, %s299
      $region44: #{_ltv_vf_impl.1} parent=39 // pred_fallthru
        _
    $region40: #{_ltv_vf_impl.1} parent=5 // pred_fallthru
      _
  $region6: #{_ltv_vf_impl.1} parent=0 // loop_footer
    %s13 = sadd.s32 1, %s9
  $region7: #{_ltv_vf_impl.1} parent=0 // loop_footer_branch
    %8 = sbr.rel target = $region3
  $region8: #{_ltv_vf_impl.1} parent=0 // loop_exit
    _

</llo_original>
